<compile_context>
chip_gen: v7x
topology: tpu7x:2x2x1
jax: 0.10.0
libtpu: 0.0.40
codegen_flags: <defaults>
</compile_context>

<pallas_src>
import functools

import jax
import jax.numpy as jnp
from jax.experimental import pallas as pl
from jax.experimental.pallas import tpu as pltpu

# Module defaults: BinaryFocalLoss_2(alpha=1, gamma=2, logits=True, reduce=True)
ALPHA = 1.0
GAMMA = 2.0
LOGITS = True

_LANE = 128
# 512 rows * 128 lanes * 4 B * 2 inputs * 2 (double-buffer) ~= 1 MiB VMEM,
# comfortably inside the default scoped-VMEM budget on v5e/v6e/v7x.
_MAX_TILE_ROWS = 512


def _focal_loss_kernel(x_ref, t_ref, out_ref, acc_ref, *, n_valid):
    i = pl.program_id(0)

    @pl.when(i == 0)
    def _init():
        acc_ref[0, 0] = jnp.float32(0.0)

    x = x_ref[...].astype(jnp.float32)        # (tile_rows, 128)
    t = t_ref[...].astype(jnp.float32)        # (tile_rows, 128)

    if LOGITS:
        # Numerically stable BCE-with-logits:
        #   max(x, 0) - x*t + log(1 + exp(-|x|))
        bce = jnp.maximum(x, 0.0) - x * t + jnp.log(1.0 + jnp.exp(-jnp.abs(x)))
    else:
        eps = jnp.float32(1e-12)
        bce = -(t * jnp.log(x + eps) + (1.0 - t) * jnp.log(1.0 - x + eps))

    pt = jnp.exp(-bce)
    alpha_t = t * ALPHA + (1.0 - t) * (1.0 - ALPHA)
    one_minus_pt = 1.0 - pt
    if GAMMA == 2.0:
        mod = one_minus_pt * one_minus_pt
    else:
        mod = jnp.power(one_minus_pt, jnp.float32(GAMMA))
    f_loss = alpha_t * mod * bce              # (tile_rows, 128)

    # Mask the zero-padded tail (padded logits would contribute log(2) each).
    rows, lanes = x.shape
    row = jax.lax.broadcasted_iota(jnp.int32, (rows, lanes), 0)
    lane = jax.lax.broadcasted_iota(jnp.int32, (rows, lanes), 1)
    flat_idx = (i * rows + row) * lanes + lane
    f_loss = jnp.where(flat_idx < n_valid, f_loss, 0.0)

    acc_ref[0, 0] += jnp.sum(f_loss)

    @pl.when(i == pl.num_programs(0) - 1)
    def _finalize():
        out_ref[0, 0] = acc_ref[0, 0] / jnp.float32(n_valid)


def binary_focal_loss(inputs, targets):
    """Binary focal loss, alpha=1, gamma=2, logits=True, reduce=True -> scalar."""
    # TODO(synk): reduce=False (unreduced per-element output) path not implemented.
    x = inputs.reshape(-1)
    t = targets.reshape(-1)
    n = x.shape[0]

    rows = -(-n // _LANE)                                  # ceil(n / 128)
    tile_rows = min(_MAX_TILE_ROWS, -(-rows // 8) * 8)     # sublane-aligned
    rows_padded = -(-rows // tile_rows) * tile_rows
    pad = rows_padded * _LANE - n
    if pad:
        x = jnp.pad(x, (0, pad))
        t = jnp.pad(t, (0, pad))
    x2 = x.reshape(rows_padded, _LANE)
    t2 = t.reshape(rows_padded, _LANE).astype(x2.dtype)

    grid = (rows_padded // tile_rows,)
    kernel = functools.partial(_focal_loss_kernel, n_valid=n)

    out = pl.pallas_call(
        kernel,
        out_shape=jax.ShapeDtypeStruct((1, 1), jnp.float32),
        grid_spec=pltpu.PrefetchScalarGridSpec(
            num_scalar_prefetch=0,
            grid=grid,
            in_specs=[
                pl.BlockSpec((tile_rows, _LANE), lambda i: (i, 0)),
                pl.BlockSpec((tile_rows, _LANE), lambda i: (i, 0)),
            ],
            out_specs=pl.BlockSpec(memory_space=pltpu.SMEM),
            scratch_shapes=[pltpu.SMEM((1, 1), jnp.float32)],
        ),
        compiler_params=pltpu.CompilerParams(
            dimension_semantics=("arbitrary",),
        ),
        cost_estimate=pl.CostEstimate(
            flops=10 * n,
            transcendentals=3 * n,
            bytes_accessed=2 * n * x2.dtype.itemsize + 4,
        ),
    )(x2, t2)
    return out[0, 0]


def _reference(inputs, targets, alpha=ALPHA, gamma=GAMMA):
    x = inputs.reshape(-1).astype(jnp.float32)
    t = targets.reshape(-1).astype(jnp.float32)
    bce = jnp.maximum(x, 0.0) - x * t + jnp.log1p(jnp.exp(-jnp.abs(x)))
    pt = jnp.exp(-bce)
    alpha_t = t * alpha + (1.0 - t) * (1.0 - alpha)
    return jnp.mean(alpha_t * (1.0 - pt) ** gamma * bce)


if __name__ == "__main__":
    key = jax.random.PRNGKey(0)
    kx, kt, kx2, kt2 = jax.random.split(key, 4)

    # Exact multiple of the (rows, 128) layout: 2*4*16*16 = 2048 elements.
    shape = (2, 4, 16, 16)
    inputs = jax.random.normal(kx, shape, dtype=jnp.float32)
    targets = jax.random.bernoulli(kt, 0.5, shape).astype(jnp.float32)

    loss = binary_focal_loss(inputs, targets)
    jax.block_until_ready(loss)
    ref = _reference(inputs, targets)
    assert jnp.allclose(loss, ref, atol=1e-5, rtol=1e-5), (loss, ref)

    # Ragged size (105 elements) to exercise the padded-tail masking path.
    shape2 = (3, 5, 7)
    inputs2 = jax.random.normal(kx2, shape2, dtype=jnp.float32)
    targets2 = jax.random.bernoulli(kt2, 0.5, shape2).astype(jnp.float32)

    loss2 = binary_focal_loss(inputs2, targets2)
    jax.block_until_ready(loss2)
    ref2 = _reference(inputs2, targets2)
    assert jnp.allclose(loss2, ref2, atol=1e-5, rtol=1e-5), (loss2, ref2)

    print("KERNEL_OK")
</pallas_src>

<mosaic_0001>
module attributes {stable_mosaic.version = 11 : i64} {
  func.func @_focal_loss_kernel(%arg0: i32, %arg1: memref<16x128xf32, #tpu.memory_space<vmem>>, %arg2: memref<16x128xf32, #tpu.memory_space<vmem>>, %arg3: memref<1x1xf32, #tpu.memory_space<smem>>, %arg4: memref<1x1xf32, #tpu.memory_space<smem>>) attributes {dimension_semantics = [#tpu.dimension_semantics<arbitrary>], iteration_bounds = array<i64: 1>, scalar_prefetch = 0 : i64, scratch_operands = 1 : i64, tpu.core_type = #tpu.core_type<tc>, window_params = [{transform_indices = @transform_0, window_bounds = array<i64: 16, 128>}, {transform_indices = @transform_1, window_bounds = array<i64: 16, 128>}, {transform_indices = @transform_2, window_bounds = array<i64: 1, 1>}]} {
    %c0_i32 = arith.constant 0 : i32
    %0 = arith.cmpi eq, %arg0, %c0_i32 : i32
    %1 = arith.extui %0 : i1 to i32
    %c0_i32_0 = arith.constant 0 : i32
    %2 = arith.cmpi ne, %1, %c0_i32_0 : i32
    scf.if %2 {
      %cst_19 = arith.constant 0.000000e+00 : f32
      %c0_20 = arith.constant 0 : index
      %c0_21 = arith.constant 0 : index
      %54 = memref.load %arg4[%c0_20, %c0_21] : memref<1x1xf32, #tpu.memory_space<smem>>
      memref.store %cst_19, %arg4[%c0_20, %c0_21] : memref<1x1xf32, #tpu.memory_space<smem>>
    } else {
    }
    %c0 = arith.constant 0 : index
    %c0_1 = arith.constant 0 : index
    %3 = vector.load %arg1[%c0, %c0_1] : memref<16x128xf32, #tpu.memory_space<vmem>>, vector<16x128xf32>
    %c0_2 = arith.constant 0 : index
    %c0_3 = arith.constant 0 : index
    %4 = vector.load %arg2[%c0_2, %c0_3] : memref<16x128xf32, #tpu.memory_space<vmem>>, vector<16x128xf32>
    %cst = arith.constant 0.000000e+00 : f32
    %5 = vector.broadcast %cst : f32 to vector<16x128xf32>
    %6 = arith.maximumf %3, %5 : vector<16x128xf32>
    %7 = arith.mulf %3, %4 : vector<16x128xf32>
    %8 = arith.subf %6, %7 : vector<16x128xf32>
    %9 = math.absf %3 : vector<16x128xf32>
    %cst_4 = arith.constant 0.000000e+00 : f32
    %10 = vector.broadcast %cst_4 : f32 to vector<16x128xf32>
    %11 = arith.subf %10, %9 : vector<16x128xf32>
    %12 = math.exp %11 : vector<16x128xf32>
    %cst_5 = arith.constant 1.000000e+00 : f32
    %13 = vector.broadcast %cst_5 : f32 to vector<16x128xf32>
    %14 = arith.addf %13, %12 : vector<16x128xf32>
    %15 = math.log %14 : vector<16x128xf32>
    %16 = arith.addf %8, %15 : vector<16x128xf32>
    %cst_6 = arith.constant 0.000000e+00 : f32
    %17 = vector.broadcast %cst_6 : f32 to vector<16x128xf32>
    %18 = arith.subf %17, %16 : vector<16x128xf32>
    %19 = math.exp %18 : vector<16x128xf32>
    %cst_7 = arith.constant 1.000000e+00 : f32
    %20 = vector.broadcast %cst_7 : f32 to vector<16x128xf32>
    %21 = arith.mulf %4, %20 : vector<16x128xf32>
    %cst_8 = arith.constant 1.000000e+00 : f32
    %22 = vector.broadcast %cst_8 : f32 to vector<16x128xf32>
    %23 = arith.subf %22, %4 : vector<16x128xf32>
    %cst_9 = arith.constant 0.000000e+00 : f32
    %24 = vector.broadcast %cst_9 : f32 to vector<16x128xf32>
    %25 = arith.mulf %23, %24 : vector<16x128xf32>
    %26 = arith.addf %21, %25 : vector<16x128xf32>
    %cst_10 = arith.constant 1.000000e+00 : f32
    %27 = vector.broadcast %cst_10 : f32 to vector<16x128xf32>
    %28 = arith.subf %27, %19 : vector<16x128xf32>
    %29 = arith.mulf %28, %28 : vector<16x128xf32>
    %30 = arith.mulf %26, %29 : vector<16x128xf32>
    %31 = arith.mulf %30, %16 : vector<16x128xf32>
    %32 = tpu.iota {dimensions = array<i32: 0>} : vector<16x128xi32>
    %33 = tpu.iota {dimensions = array<i32: 1>} : vector<16x128xi32>
    %c16_i32 = arith.constant 16 : i32
    %34 = arith.muli %arg0, %c16_i32 : i32
    %35 = vector.broadcast %34 : i32 to vector<16x128xi32>
    %36 = arith.addi %35, %32 : vector<16x128xi32>
    %c128_i32 = arith.constant 128 : i32
    %37 = vector.broadcast %c128_i32 : i32 to vector<16x128xi32>
    %38 = arith.muli %36, %37 : vector<16x128xi32>
    %39 = arith.addi %38, %33 : vector<16x128xi32>
    %c2048_i32 = arith.constant 2048 : i32
    %40 = vector.broadcast %c2048_i32 : i32 to vector<16x128xi32>
    %41 = arith.cmpi slt, %39, %40 : vector<16x128xi32>
    %cst_11 = arith.constant 0.000000e+00 : f32
    %42 = vector.broadcast %cst_11 : f32 to vector<16x128xf32>
    %43 = arith.select %41, %31, %42 : vector<16x128xi1>, vector<16x128xf32>
    %c0_12 = arith.constant 0 : index
    %c0_13 = arith.constant 0 : index
    %44 = memref.load %arg4[%c0_12, %c0_13] : memref<1x1xf32, #tpu.memory_space<smem>>
    %45 = vector.shape_cast %43 : vector<16x128xf32> to vector<1x16x128xf32>
    %cst_14 = arith.constant dense<0.000000e+00> : vector<1xf32>
    %46 = vector.multi_reduction <add>, %45, %cst_14 [1, 2] : vector<1x16x128xf32> to vector<1xf32>
    %47 = vector.shape_cast %46 : vector<1xf32> to vector<1x1x1xf32>
    %48 = vector.extract %47[0, 0, 0] : f32 from vector<1x1x1xf32>
    %49 = arith.addf %44, %48 : f32
    %c0_15 = arith.constant 0 : index
    %c0_16 = arith.constant 0 : index
    %50 = memref.load %arg4[%c0_15, %c0_16] : memref<1x1xf32, #tpu.memory_space<smem>>
    memref.store %49, %arg4[%c0_15, %c0_16] : memref<1x1xf32, #tpu.memory_space<smem>>
    %c0_i32_17 = arith.constant 0 : i32
    %51 = arith.cmpi eq, %arg0, %c0_i32_17 : i32
    %52 = arith.extui %51 : i1 to i32
    %c0_i32_18 = arith.constant 0 : i32
    %53 = arith.cmpi ne, %52, %c0_i32_18 : i32
    scf.if %53 {
      %c0_19 = arith.constant 0 : index
      %c0_20 = arith.constant 0 : index
      %54 = memref.load %arg4[%c0_19, %c0_20] : memref<1x1xf32, #tpu.memory_space<smem>>
      %cst_21 = arith.constant 2.048000e+03 : f32
      %55 = arith.divf %54, %cst_21 : f32
      %c0_22 = arith.constant 0 : index
      %c0_23 = arith.constant 0 : index
      %56 = memref.load %arg3[%c0_22, %c0_23] : memref<1x1xf32, #tpu.memory_space<smem>>
      memref.store %55, %arg3[%c0_22, %c0_23] : memref<1x1xf32, #tpu.memory_space<smem>>
    } else {
    }
    return
  }
  func.func @transform_0(%arg0: i32) -> (i32, i32) {
    %c0_i32 = arith.constant 0 : i32
    %c0_i32_0 = arith.constant 0 : i32
    return %arg0, %c0_i32 : i32, i32
  }
  func.func @transform_1(%arg0: i32) -> (i32, i32) {
    %c0_i32 = arith.constant 0 : i32
    %c0_i32_0 = arith.constant 0 : i32
    return %arg0, %c0_i32 : i32, i32
  }
  func.func @transform_2(%arg0: i32) -> (i32, i32) {
    %c0_i32 = arith.constant 0 : i32
    %c0_i32_0 = arith.constant 0 : i32
    %c0_i32_1 = arith.constant 0 : i32
    return %c0_i32, %c0_i32_0 : i32, i32
  }
}

</mosaic_0001>

<llo_original>
// kernel: tpu_custom_call.1
$region0: #{tpu_custom_call.1}
  #allocation0 [shape = 'u32[]', space=smem, size = 0x4, offset = 0x4, fixed_abs, tag = 'smem constant byte address 0x4 - core index']
  #allocation1 [shape = 'u32[144,128]{1,0:T(1,128)}', space=vmem, size = 0x12000, scoped, tag = 'internal scratch']
  #allocation2 [shape = 'f32[1,1]{1,0:T(1,128)}', space=smem, size = 0x200, scoped, tag = 'scratch operand']
  %s0 = inlined_call_operand.hbm [shape: f32[16,128], index: 0, kind: input, shape index: {}]
  %s1 = inlined_call_operand.hbm [shape: f32[16,128], index: 1, kind: input, shape index: {}]
  %s2 = inlined_call_operand.hbm [shape: f32[1,1], index: 2, kind: output, shape index: {}]
  %s3 = sld [smem:[#allocation0]]
  $region34: #{tpu_custom_call.1} parent=0
    _
  %s5 = ssub.s32 1, %s3
  %s6 = scalar_select 0, %s5, %s3
  $region1: #{tpu_custom_call.1} parent=0
    #allocation3 [shape = 'u8[8192]{0}', space=vmem, size = 0x2000, scoped, tag = 'input window, operand 0, single buffered']
    #allocation4 [shape = 's32[1]{0}', space=sflag, size = 0x4, scoped, tag = 'scoped memory for tpu_custom_call.1']
    #allocation5 [shape = 's32[1]{0}', space=sflag, size = 0x4, scoped, tag = 'scoped memory for tpu_custom_call.1']
    #allocation6 [shape = 'u8[8192]{0}', space=vmem, size = 0x2000, scoped, tag = 'input window, operand 1, single buffered']
    #allocation7 [shape = 's32[1]{0}', space=sflag, size = 0x4, scoped, tag = 'scoped memory for tpu_custom_call.1']
    #allocation8 [shape = 'u8[512]{0}', space=smem, size = 0x200, scoped, tag = 'output window, operand 0, single buffered']
    %7 = vsyncpa [#allocation4], 0
    %8 = vsyncpa [#allocation7], 0
    %9 = vsyncpa [#allocation5], 0
    // Predicated region
    $region2: #{tpu_custom_call.1} parent=1 // pred_check
      _
    $region3: #{tpu_custom_call.1} parent=1 // pred_check_branch
      %11 = sbr.rel (0) target = $region5
    $region4: #{tpu_custom_call.1} parent=1 // pred_region
      %s13 = ssub.s32 256, 256
      %14 = vsyncadd [#allocation4], %s13
      %s15 = sshll.u32 [#allocation3], 4
      %s16 = int_to_ptr.vmem [resolvable:$true] %s15
      %21 = dma.hbm_to_vmem [thread:$0]  %s0, 256, %s16, [#allocation4], 128, 128, 8
    $region5: #{tpu_custom_call.1} parent=1 // pred_fallthru
      _
    // Predicated region
    $region6: #{tpu_custom_call.1} parent=1 // pred_check
      _
    $region7: #{tpu_custom_call.1} parent=1 // pred_check_branch
      %23 = sbr.rel (0) target = $region9
    $region8: #{tpu_custom_call.1} parent=1 // pred_region
      %s25 = ssub.s32 256, 256
      %26 = vsyncadd [#allocation7], %s25
      %s27 = sshll.u32 [#allocation6], 4
      %s28 = int_to_ptr.vmem [resolvable:$true] %s27
      %33 = dma.hbm_to_vmem [thread:$0]  %s1, 256, %s28, [#allocation7], 128, 128, 8
    $region9: #{tpu_custom_call.1} parent=1 // pred_fallthru
      _
    // Predicated region
    $region10: #{tpu_custom_call.1} parent=1 // pred_check
      _
    $region11: #{tpu_custom_call.1} parent=1 // pred_check_branch
      %35 = sbr.rel (0) target = $region13
    $region12: #{tpu_custom_call.1} parent=1 // pred_region
      %36 = dma.done [#allocation4], 256
    $region13: #{tpu_custom_call.1} parent=1 // pred_fallthru
      _
    // Predicated region
    $region14: #{tpu_custom_call.1} parent=1 // pred_check
      _
    $region15: #{tpu_custom_call.1} parent=1 // pred_check_branch
      %38 = sbr.rel (0) target = $region17
    $region16: #{tpu_custom_call.1} parent=1 // pred_region
      %39 = dma.done [#allocation7], 256
    $region17: #{tpu_custom_call.1} parent=1 // pred_fallthru
      _
    %p40 = scmp.eq.s32.totalorder 0, 0
    // Predicated region
    $region18: #{tpu_custom_call.1} parent=1 // pred_check
      %p41 = pneg %p40
    $region19: #{tpu_custom_call.1} parent=1 // pred_check_branch
      %43 = sbr.rel (%p41) target = $region21
    $region20: #{tpu_custom_call.1} parent=1 // pred_region
      %s44 = scalar_lea.smem [#allocation2], 0
      %45 = sst [smem:[%s44]] 0.0
    $region21: #{tpu_custom_call.1} parent=1 // pred_fallthru
      _
    %v46 = vld [vmem:[#allocation3] sm:$0xff]
    %v47 = vld [vmem:[#allocation3 + $0x8] sm:$0xff]
    %v48 = vld [vmem:[#allocation6] sm:$0xff]
    %v49 = vld [vmem:[#allocation6 + $0x8] sm:$0xff]
    %v50 = vmax.f32 %v46, 0.0
    %v51 = vmax.f32 %v47, 0.0
    %v52 = vmul.f32 %v46, %v48
    %v53 = vmul.f32 %v47, %v49
    %v54 = vsub.f32 %v50, %v52
    %v55 = vsub.f32 %v51, %v53
    %v56 = vand.u32 2147483647, %v46
    %v57 = vand.u32 2147483647, %v47
    %v58 = vsub.f32 0.0, %v56
    %v59 = vsub.f32 0.0, %v57
    %v60 = vmul.f32 %v58, 1.442695
    %v61 = vpow.pop %v60
    %v62 = vmul.f32 %v59, 1.442695
    %v63 = vpow.pop %v62
    %v64 = vadd.f32 %v61, 1.0
    %v65 = vadd.f32 %v63, 1.0
    %v66 = vlog2.pop %v64
    %v67 = vmul.f32 %v66, 0.6931472
    %v68 = vlog2.pop %v65
    %v69 = vmul.f32 %v68, 0.6931472
    %v70 = vadd.f32 %v54, %v67
    %v71 = vadd.f32 %v55, %v69
    %v72 = vsub.f32 0.0, %v70
    %v73 = vsub.f32 0.0, %v71
    %v74 = vmul.f32 %v72, 1.442695
    %v75 = vpow.pop %v74
    %v76 = vmul.f32 %v73, 1.442695
    %v77 = vpow.pop %v76
    %v78 = vsub.f32 1.0, %v48
    %v79 = vsub.f32 1.0, %v49
    %v80 = vmul.f32 %v78, 0.0
    %v81 = vmul.f32 %v79, 0.0
    %v82 = vadd.f32 %v48, %v80
    %v83 = vadd.f32 %v49, %v81
    %v84 = vsub.f32 1.0, %v75
    %v85 = vsub.f32 1.0, %v77
    %v86 = vmul.f32 %v84, %v84
    %v87 = vmul.f32 %v85, %v85
    %v88 = vmul.f32 %v82, %v86
    %v89 = vmul.f32 %v83, %v87
    %v90 = vmul.f32 %v88, %v70
    %v91 = vmul.f32 %v89, %v71
    %v92 = vlaneseq
    %v93 = vshrl.u32 %v92, 7
    %v94 = vadd.s32 %v93, 8
    %v95 = vlaneseq
    %v96 = vand.u32 %v95, 127
    %s97 = smul.u32 0, 16
    %v98 = vstv %s97
    %v99 = vadd.s32 %v98, %v93
    %v100 = vadd.s32 %v98, %v94
    %v101 = vmul.u32 %v99, 128
    %v102 = vmul.u32 %v100, 128
    %v103 = vadd.s32 %v101, %v96
    %v104 = vadd.s32 %v102, %v96
    %vm105 = vcmp.lt.s32.totalorder %v103, 2048
    %vm106 = vcmp.lt.s32.totalorder %v104, 2048
    %v107 = vsel %vm105, %v90, 0.0
    %v108 = vsel %vm106, %v91, 0.0
    %s109 = sld [smem:[#allocation2]]
    %v110 = vadd.f32 %v107, %v108
    %111 = vadd.xlane.f32.xlu0 %v110
    %v112 = vpop.xlane.xlu0 %111
    %v113 = vrot.slane %v112, 4
    %v114 = vadd.f32 %v112, %v113
    %v115 = vrot.slane %v114, 2
    %v116 = vadd.f32 %v114, %v115
    %v117 = vrot.slane %v116, 1
    %v118 = vadd.f32 %v116, %v117
    %s119 = vtos %v118
    %s120 = sadd.f32 %s109, %s119
    %s121 = scalar_lea.smem [#allocation2], 0
    %122 = sst [smem:[%s121]] %s120
    // Predicated region
    $region22: #{tpu_custom_call.1} parent=1 // pred_check
      %p123 = pneg %p40
    $region23: #{tpu_custom_call.1} parent=1 // pred_check_branch
      %125 = sbr.rel (%p123) target = $region25
    $region24: #{tpu_custom_call.1} parent=1 // pred_region
      %s126 = sld [smem:[#allocation2]]
      %v127 = vrcp.pop 2048.0
      %s128 = vtos %v127
      %s129 = smul.f32 %s126, %s128
      %s130 = scalar_lea.smem [#allocation8], 0
      %131 = sst [smem:[%s130]] %s129
    $region25: #{tpu_custom_call.1} parent=1 // pred_fallthru
      _
    // Predicated region
    $region26: #{tpu_custom_call.1} parent=1 // pred_check
      _
    $region27: #{tpu_custom_call.1} parent=1 // pred_check_branch
      %133 = sbr.rel (0) target = $region29
    $region28: #{tpu_custom_call.1} parent=1 // pred_region
      %s135 = ssub.s32 16, 16
      %136 = vsyncadd [#allocation5], %s135
      %139 = dma.smem_to_hbm [#allocation8], 16, %s2, [#allocation5]
    $region29: #{tpu_custom_call.1} parent=1 // pred_fallthru
      _
    // Predicated region
    $region30: #{tpu_custom_call.1} parent=1 // pred_check
      _
    $region31: #{tpu_custom_call.1} parent=1 // pred_check_branch
      %141 = sbr.rel (0) target = $region33
    $region32: #{tpu_custom_call.1} parent=1 // pred_region
      %142 = dma.done [#allocation5], 16
    $region33: #{tpu_custom_call.1} parent=1 // pred_fallthru
      _
    %143 = sfence
    %144 = vsyncpa [#allocation4], 1
    %145 = vsyncpa [#allocation7], 1
    %146 = vsyncpa [#allocation5], 1

</llo_original>
